<compile_context>
chip_gen: v7x
topology: tpu7x:2x2x1
jax: 0.10.0
libtpu: 0.0.40
codegen_flags: <defaults>
</compile_context>

<pallas_src>
import jax
import jax.numpy as jnp
from jax.experimental import pallas as pl
from jax.experimental.pallas import tpu as pltpu


def _round_up(x, m):
    return ((x + m - 1) // m) * m


def _vmem_capacity_bytes():
    try:
        return int(pltpu.get_tpu_info().vmem_capacity_bytes)
    except Exception:
        return 64 * 1024 * 1024  # conservative (v7x per-TC) fallback


def _make_trades_kernel(nk):
    """Build the kernel body; `nk` (number of K steps) is static."""
    single_k = (nk == 1)

    def kernel(i_ref,                    # scalar prefetch: model index (SMEM)
               xc_ref, xa_ref,           # (tm, tk) activation tiles (clean/adv)
               w1_ref, b1_ref,           # (1, tk, Hp) bf16 / (1, 1, Hp) f32
               w2_ref, b2_ref,           # (1, Hp, Cp) bf16 / (1, 1, Cp) f32
               oc_ref, oa_ref,           # (tm, Cp) f32 outputs
               *scratch):                # [(2*tm, Hp) f32 acc] iff nk > 1
        del i_ref  # only consumed by the index_maps
        tm = oc_ref.shape[0]

        # Fuse clean + adversarial along M: one LHS, ONE dot per layer.
        # Concat is done in f32 (tm is a multiple of 8 -> sublane aligned),
        # then cast once to bf16 for the MXU.
        x = jnp.concatenate([xc_ref[...], xa_ref[...]], axis=0)
        x = x.astype(jnp.bfloat16)                       # (2*tm, tk)
        w1 = w1_ref[0]                                   # (tk, Hp) bf16
        part = jnp.dot(x, w1, preferred_element_type=jnp.float32)  # (2*tm, Hp)

        def epilogue(h1):
            b1 = b1_ref[0]                               # (1, Hp) f32
            w2 = w2_ref[0]                               # (Hp, Cp) bf16
            b2 = b2_ref[0]                               # (1, Cp) f32
            h = jnp.maximum(h1 + b1, 0.0).astype(jnp.bfloat16)
            out = jnp.dot(h, w2, preferred_element_type=jnp.float32) + b2
            oc_ref[...] = out[:tm].astype(oc_ref.dtype)
            oa_ref[...] = out[tm:].astype(oa_ref.dtype)

        if single_k:
            # No accumulator, no init/RMW: layer 2 + epilogue immediately.
            epilogue(part)
        else:
            acc_ref, = scratch
            k = pl.program_id(1)

            @pl.when(k == 0)
            def _():
                acc_ref[...] = jnp.zeros_like(acc_ref)

            acc_ref[...] += part

            @pl.when(k == nk - 1)
            def _():
                epilogue(acc_ref[...])

    return kernel


def mlp_forward_pallas(i_arr, x_clean, x_adv, w1, b1, w2, b2, *,
                       tm, tk, vmem_cap):
    """x_clean/x_adv: (B_pad, D_pad) f32 -> two (B_pad, C_pad) f32 logit slabs."""
    b_pad, d_pad = x_clean.shape
    h_pad = w1.shape[2]
    c_pad = w2.shape[2]
    assert b_pad % tm == 0 and d_pad % tk == 0
    nk = d_pad // tk
    grid = (b_pad // tm, nk)  # (row tiles [parallel], K tiles [arbitrary])

    kernel = _make_trades_kernel(nk)
    scratch = [pltpu.VMEM((2 * tm, h_pad), jnp.float32)] if nk > 1 else []

    x_bytes = jnp.dtype(x_clean.dtype).itemsize
    w_bytes = jnp.dtype(w1.dtype).itemsize
    need = (2 * (2 * tm * tk * x_bytes + tk * h_pad * w_bytes)   # x + W1, 2-buffered
            + 2 * 2 * (tm * c_pad * 4)                           # two outputs
            + h_pad * c_pad * w_bytes + 2 * (h_pad + c_pad) * 4  # W2 + biases
            + (2 * tm * h_pad * 4 if nk > 1 else 0))             # accumulator
    vmem_limit = int(min(vmem_cap * 3 // 4,
                         max(32 * 1024 * 1024, need + (4 << 20))))

    # NOTE: when nk > 1, W2/b1/b2 have a constant index_map so they never
    # re-DMA; pipeline_mode=pl.Buffered(1) could reclaim their second buffer
    # on VMEM-tight v7x configs (measurable-only win, left at default here).
    return pl.pallas_call(
        kernel,
        out_shape=(jax.ShapeDtypeStruct((b_pad, c_pad), jnp.float32),
                   jax.ShapeDtypeStruct((b_pad, c_pad), jnp.float32)),
        grid_spec=pltpu.PrefetchScalarGridSpec(
            num_scalar_prefetch=1,
            grid=grid,
            in_specs=[
                pl.BlockSpec((tm, tk), lambda m, k, i: (m, k)),                # x_clean
                pl.BlockSpec((tm, tk), lambda m, k, i: (m, k)),                # x_adv
                pl.BlockSpec((1, tk, h_pad), lambda m, k, i: (i[0], k, 0)),    # W1
                pl.BlockSpec((1, 1, h_pad), lambda m, k, i: (i[0], 0, 0)),     # b1
                pl.BlockSpec((1, h_pad, c_pad), lambda m, k, i: (i[0], 0, 0)), # W2
                pl.BlockSpec((1, 1, c_pad), lambda m, k, i: (i[0], 0, 0)),     # b2
            ],
            out_specs=[
                pl.BlockSpec((tm, c_pad), lambda m, k, i: (m, 0)),
                pl.BlockSpec((tm, c_pad), lambda m, k, i: (m, 0)),
            ],
            scratch_shapes=scratch,
        ),
        compiler_params=pltpu.CompilerParams(
            dimension_semantics=("parallel", "arbitrary"),
            vmem_limit_bytes=vmem_limit),
    )(i_arr, x_clean, x_adv, w1, b1, w2, b2)


class TradesLossPallas:
    """JAX/Pallas port of TradesLoss.forward with stacked synthetic MLPs."""

    def __init__(self, num_models, beta, in_dim, hidden, num_classes, key):
        self.beta = beta
        self.num_classes = num_classes
        self.in_dim = in_dim
        h_pad = _round_up(hidden, 128)
        c_pad = _round_up(num_classes, 128)

        # Generation-aware K-tile: collapse the K axis (tk = padded D) when it
        # fits the VMEM budget; otherwise cap tk so the double-buffered
        # footprint (worst-case tm = 128) stays within ~1/3 of VMEM.
        self.vmem_cap = _vmem_capacity_bytes()
        budget = self.vmem_cap // 3
        denom = 2 * (2 * 128 * 4 + h_pad * 2)       # bytes per unit of tk
        tk_cap = max(128, (budget // denom) // 128 * 128)
        self.tk = min(_round_up(in_dim, 128), tk_cap)
        self.d_pad = _round_up(in_dim, self.tk)

        keys = jax.random.split(key, 4)
        scale1 = 1.0 / jnp.sqrt(jnp.float32(in_dim))
        scale2 = 1.0 / jnp.sqrt(jnp.float32(hidden))
        w1 = jax.random.normal(keys[0], (num_models, in_dim, hidden),
                               jnp.float32) * scale1
        b1 = jax.random.normal(keys[1], (num_models, 1, hidden),
                               jnp.float32) * 0.01
        w2 = jax.random.normal(keys[2], (num_models, hidden, num_classes),
                               jnp.float32) * scale2
        b2 = jax.random.normal(keys[3], (num_models, 1, num_classes),
                               jnp.float32) * 0.01
        # Zero-pad in_dim -> d_pad, hidden -> h_pad, classes -> c_pad so every
        # matmul / load / store is lane-dense; zero padding is a mathematical
        # no-op for the real slice.  Weights stored bf16 (MXU-native, half the
        # HBM traffic); biases stay f32.
        self.W1 = jnp.pad(w1, ((0, 0), (0, self.d_pad - in_dim),
                               (0, h_pad - hidden))).astype(jnp.bfloat16)
        self.b1 = jnp.pad(b1, ((0, 0), (0, 0), (0, h_pad - hidden)))
        self.W2 = jnp.pad(w2, ((0, 0), (0, h_pad - hidden),
                               (0, c_pad - num_classes))).astype(jnp.bfloat16)
        self.b2 = jnp.pad(b2, ((0, 0), (0, 0), (0, c_pad - num_classes)))

    def __call__(self, inputs, inputs_adv, i):
        # inputs, inputs_adv: NCHW (B, C, H, W)
        b = inputs.shape[0]
        x_clean = inputs.reshape(b, -1).astype(jnp.float32)
        x_adv = inputs_adv.reshape(b, -1).astype(jnp.float32)
        d = x_clean.shape[1]
        assert d == self.in_dim

        # Row tile: multiple of 8 sublanes; split into >=2 tiles when the
        # batch allows it so the "parallel" axis shards across v7x's two TCs.
        tm = min(128, _round_up(b, 8))
        if tm > 8 and _round_up(b, tm) // tm < 2:
            tm = _round_up(-(-b // 2), 8)
        b_pad = _round_up(b, tm)

        if b_pad != b or self.d_pad != d:
            pad_cfg = ((0, b_pad - b), (0, self.d_pad - d))
            x_clean = jnp.pad(x_clean, pad_cfg)
            x_adv = jnp.pad(x_adv, pad_cfg)

        i_arr = jnp.asarray([i], dtype=jnp.int32)   # model selector (prefetched)
        logits_c, logits_a = mlp_forward_pallas(
            i_arr, x_clean, x_adv, self.W1, self.b1, self.W2, self.b2,
            tm=tm, tk=self.tk, vmem_cap=self.vmem_cap)
        # Matches torch: (models[i](inputs), models[i](inputs_adv))
        return (logits_c[:b, :self.num_classes],
                logits_a[:b, :self.num_classes])


if __name__ == "__main__":
    key = jax.random.PRNGKey(0)
    k_x, k_adv, k_params = jax.random.split(key, 3)

    B, C, H, W = 2, 4, 16, 16
    hidden, num_classes, num_models = 32, 10, 2
    in_dim = C * H * W

    inputs = jax.random.normal(k_x, (B, C, H, W), jnp.float32)
    # adversarial example = clean + small perturbation (deterministic)
    inputs_adv = inputs + 0.03 * jax.random.normal(k_adv, (B, C, H, W),
                                                   jnp.float32)

    module = TradesLossPallas(num_models=num_models, beta=6.0,
                              in_dim=in_dim, hidden=hidden,
                              num_classes=num_classes, key=k_params)

    logits_clean, logits_adv = module(inputs, inputs_adv, i=1)
    jax.block_until_ready((logits_clean, logits_adv))

    assert logits_clean.shape == (B, num_classes)
    assert logits_adv.shape == (B, num_classes)

    # Pure-JAX f32 reference on the same stored weights.  The kernel uses bf16
    # MXU operands with f32 accumulation, so allow a small tolerance.
    def ref(x, i):
        xf = x.reshape(B, -1).astype(jnp.float32)
        w1 = module.W1[i, :in_dim, :hidden].astype(jnp.float32)
        b1 = module.b1[i, :, :hidden]
        w2 = module.W2[i, :hidden, :num_classes].astype(jnp.float32)
        b2 = module.b2[i, :, :num_classes]
        h = jnp.maximum(xf @ w1 + b1, 0.0)
        return h @ w2 + b2

    assert jnp.allclose(logits_clean, ref(inputs, 1), atol=5e-2, rtol=5e-2)
    assert jnp.allclose(logits_adv, ref(inputs_adv, 1), atol=5e-2, rtol=5e-2)

    print("KERNEL_OK")
</pallas_src>

<mosaic_0001>
module attributes {stable_mosaic.version = 11 : i64} {
  func.func @kernel(%arg0: i32, %arg1: i32, %arg2: memref<1xi32, #tpu.memory_space<smem>>, %arg3: memref<8x1024xf32, #tpu.memory_space<vmem>>, %arg4: memref<8x1024xf32, #tpu.memory_space<vmem>>, %arg5: memref<1x1024x128xbf16, #tpu.memory_space<vmem>>, %arg6: memref<1x1x128xf32, #tpu.memory_space<vmem>>, %arg7: memref<1x128x128xbf16, #tpu.memory_space<vmem>>, %arg8: memref<1x1x128xf32, #tpu.memory_space<vmem>>, %arg9: memref<8x128xf32, #tpu.memory_space<vmem>>, %arg10: memref<8x128xf32, #tpu.memory_space<vmem>>) attributes {dimension_semantics = [#tpu.dimension_semantics<parallel>, #tpu.dimension_semantics<arbitrary>], iteration_bounds = array<i64: 1, 1>, scalar_prefetch = 1 : i64, scratch_operands = 0 : i64, tpu.core_type = #tpu.core_type<tc>, window_params = [{transform_indices = @transform_0, window_bounds = array<i64: 8, 1024>}, {transform_indices = @transform_1, window_bounds = array<i64: 8, 1024>}, {transform_indices = @transform_2, window_bounds = array<i64: 1, 1024, 128>}, {transform_indices = @transform_3, window_bounds = array<i64: 1, 1, 128>}, {transform_indices = @transform_4, window_bounds = array<i64: 1, 128, 128>}, {transform_indices = @transform_5, window_bounds = array<i64: 1, 1, 128>}, {transform_indices = @transform_6, window_bounds = array<i64: 8, 128>}, {transform_indices = @transform_7, window_bounds = array<i64: 8, 128>}]} {
    %c0 = arith.constant 0 : index
    %c0_0 = arith.constant 0 : index
    %0 = vector.load %arg3[%c0, %c0_0] : memref<8x1024xf32, #tpu.memory_space<vmem>>, vector<8x1024xf32>
    %c0_1 = arith.constant 0 : index
    %c0_2 = arith.constant 0 : index
    %1 = vector.load %arg4[%c0_1, %c0_2] : memref<8x1024xf32, #tpu.memory_space<vmem>>, vector<8x1024xf32>
    %2 = tpu.concatenate %0, %1 in 0 : vector<8x1024xf32>, vector<8x1024xf32> -> vector<16x1024xf32>
    %3 = arith.truncf %2 : vector<16x1024xf32> to vector<16x1024xbf16>
    %c0_3 = arith.constant 0 : index
    %c0_4 = arith.constant 0 : index
    %c0_5 = arith.constant 0 : index
    %4 = vector.load %arg5[%c0_3, %c0_4, %c0_5] : memref<1x1024x128xbf16, #tpu.memory_space<vmem>>, vector<1x1024x128xbf16>
    %5 = vector.shape_cast %4 : vector<1x1024x128xbf16> to vector<1024x128xbf16>
    %cst = arith.constant dense<0.000000e+00> : vector<16x128xf32>
    %6 = tpu.matmul %3, %5, %cst {dimension_numbers = #tpu.dot_dimension_numbers<[1], [0], [0], [1], [0, 0, 1, 1], [], []>} : vector<16x1024xbf16>, vector<1024x128xbf16>, vector<16x128xf32> -> vector<16x128xf32>
    %c0_6 = arith.constant 0 : index
    %c0_7 = arith.constant 0 : index
    %c0_8 = arith.constant 0 : index
    %7 = vector.load %arg6[%c0_6, %c0_7, %c0_8] : memref<1x1x128xf32, #tpu.memory_space<vmem>>, vector<1x1x128xf32>
    %8 = vector.shape_cast %7 : vector<1x1x128xf32> to vector<1x128xf32>
    %c0_9 = arith.constant 0 : index
    %c0_10 = arith.constant 0 : index
    %c0_11 = arith.constant 0 : index
    %9 = vector.load %arg7[%c0_9, %c0_10, %c0_11] : memref<1x128x128xbf16, #tpu.memory_space<vmem>>, vector<1x128x128xbf16>
    %10 = vector.shape_cast %9 : vector<1x128x128xbf16> to vector<128x128xbf16>
    %c0_12 = arith.constant 0 : index
    %c0_13 = arith.constant 0 : index
    %c0_14 = arith.constant 0 : index
    %11 = vector.load %arg8[%c0_12, %c0_13, %c0_14] : memref<1x1x128xf32, #tpu.memory_space<vmem>>, vector<1x1x128xf32>
    %12 = vector.shape_cast %11 : vector<1x1x128xf32> to vector<1x128xf32>
    %13 = vector.broadcast %8 : vector<1x128xf32> to vector<16x128xf32>
    %14 = arith.addf %6, %13 : vector<16x128xf32>
    %cst_15 = arith.constant 0.000000e+00 : f32
    %15 = vector.broadcast %cst_15 : f32 to vector<16x128xf32>
    %16 = arith.maximumf %14, %15 : vector<16x128xf32>
    %17 = arith.truncf %16 : vector<16x128xf32> to vector<16x128xbf16>
    %cst_16 = arith.constant dense<0.000000e+00> : vector<16x128xf32>
    %18 = tpu.matmul %17, %10, %cst_16 {dimension_numbers = #tpu.dot_dimension_numbers<[1], [0], [0], [1], [0, 0, 1, 1], [], []>} : vector<16x128xbf16>, vector<128x128xbf16>, vector<16x128xf32> -> vector<16x128xf32>
    %19 = vector.broadcast %12 : vector<1x128xf32> to vector<16x128xf32>
    %20 = arith.addf %18, %19 : vector<16x128xf32>
    %21 = vector.extract_strided_slice %20 {offsets = [0, 0], sizes = [8, 128], strides = [1, 1]} : vector<16x128xf32> to vector<8x128xf32>
    %c0_17 = arith.constant 0 : index
    %c0_18 = arith.constant 0 : index
    %22 = vector.load %arg9[%c0_17, %c0_18] : memref<8x128xf32, #tpu.memory_space<vmem>>, vector<8x128xf32>
    tpu.vector_store %arg9[%c0_17, %c0_18], %21 {strides = array<i32>} : memref<8x128xf32, #tpu.memory_space<vmem>>, vector<8x128xf32>,
    %23 = vector.extract_strided_slice %20 {offsets = [8, 0], sizes = [8, 128], strides = [1, 1]} : vector<16x128xf32> to vector<8x128xf32>
    %c0_19 = arith.constant 0 : index
    %c0_20 = arith.constant 0 : index
    %24 = vector.load %arg10[%c0_19, %c0_20] : memref<8x128xf32, #tpu.memory_space<vmem>>, vector<8x128xf32>
    tpu.vector_store %arg10[%c0_19, %c0_20], %23 {strides = array<i32>} : memref<8x128xf32, #tpu.memory_space<vmem>>, vector<8x128xf32>,
    return
  }
  func.func @transform_0(%arg0: i32, %arg1: i32, %arg2: memref<1xi32, #tpu.memory_space<smem>>) -> (i32, i32) {
    %c0_i32 = arith.constant 0 : i32
    return %arg0, %arg1 : i32, i32
  }
  func.func @transform_1(%arg0: i32, %arg1: i32, %arg2: memref<1xi32, #tpu.memory_space<smem>>) -> (i32, i32) {
    %c0_i32 = arith.constant 0 : i32
    return %arg0, %arg1 : i32, i32
  }
  func.func @transform_2(%arg0: i32, %arg1: i32, %arg2: memref<1xi32, #tpu.memory_space<smem>>) -> (i32, i32, i32) {
    %c0 = arith.constant 0 : index
    %0 = memref.load %arg2[%c0] : memref<1xi32, #tpu.memory_space<smem>>
    %c0_i32 = arith.constant 0 : i32
    %c0_i32_0 = arith.constant 0 : i32
    return %0, %arg1, %c0_i32 : i32, i32, i32
  }
  func.func @transform_3(%arg0: i32, %arg1: i32, %arg2: memref<1xi32, #tpu.memory_space<smem>>) -> (i32, i32, i32) {
    %c0 = arith.constant 0 : index
    %0 = memref.load %arg2[%c0] : memref<1xi32, #tpu.memory_space<smem>>
    %c0_i32 = arith.constant 0 : i32
    %c0_i32_0 = arith.constant 0 : i32
    %c0_i32_1 = arith.constant 0 : i32
    return %0, %c0_i32, %c0_i32_0 : i32, i32, i32
  }
  func.func @transform_4(%arg0: i32, %arg1: i32, %arg2: memref<1xi32, #tpu.memory_space<smem>>) -> (i32, i32, i32) {
    %c0 = arith.constant 0 : index
    %0 = memref.load %arg2[%c0] : memref<1xi32, #tpu.memory_space<smem>>
    %c0_i32 = arith.constant 0 : i32
    %c0_i32_0 = arith.constant 0 : i32
    %c0_i32_1 = arith.constant 0 : i32
    return %0, %c0_i32, %c0_i32_0 : i32, i32, i32
  }
  func.func @transform_5(%arg0: i32, %arg1: i32, %arg2: memref<1xi32, #tpu.memory_space<smem>>) -> (i32, i32, i32) {
    %c0 = arith.constant 0 : index
    %0 = memref.load %arg2[%c0] : memref<1xi32, #tpu.memory_space<smem>>
    %c0_i32 = arith.constant 0 : i32
    %c0_i32_0 = arith.constant 0 : i32
    %c0_i32_1 = arith.constant 0 : i32
    return %0, %c0_i32, %c0_i32_0 : i32, i32, i32
  }
  func.func @transform_6(%arg0: i32, %arg1: i32, %arg2: memref<1xi32, #tpu.memory_space<smem>>) -> (i32, i32) {
    %c0_i32 = arith.constant 0 : i32
    %c0_i32_0 = arith.constant 0 : i32
    return %arg0, %c0_i32 : i32, i32
  }
  func.func @transform_7(%arg0: i32, %arg1: i32, %arg2: memref<1xi32, #tpu.memory_space<smem>>) -> (i32, i32) {
    %c0_i32 = arith.constant 0 : i32
    %c0_i32_0 = arith.constant 0 : i32
    return %arg0, %c0_i32 : i32, i32
  }
}

</mosaic_0001>

<llo_original>
// kernel: tpu_custom_call.1
$region0: #{tpu_custom_call.1}
  #allocation0 [shape = 'u32[]', space=smem, size = 0x4, offset = 0x4, fixed_abs, tag = 'smem constant byte address 0x4 - core index']
  #allocation1 [shape = 'u32[144,128]{1,0:T(1,128)}', space=vmem, size = 0x12000, scoped, tag = 'internal scratch']
  #allocation2 [shape = 's32[1]{0}', space=sflag, size = 0x4, scoped, tag = 'scoped memory for tpu_custom_call.1']
  #allocation3 [shape = 's32[1]{0:T(128)S(6)}', space=smem, size = 0x200, scoped, tag = 'prefetched SMEM operand 0']
  %s0 = inlined_call_operand.<no memory space> [shape: s32[1], index: 0, kind: input, shape index: {}]
  %s1 = inlined_call_operand.hbm [shape: f32[8,1024], index: 1, kind: input, shape index: {}]
  %s2 = inlined_call_operand.hbm [shape: f32[8,1024], index: 2, kind: input, shape index: {}]
  %s3 = inlined_call_operand.hbm [shape: bf16[2,1024,128], index: 3, kind: input, shape index: {}]
  %s4 = inlined_call_operand.vmem [shape: f32[2,1,128], index: 4, kind: input, shape index: {}]
  %s5 = inlined_call_operand.hbm [shape: bf16[2,128,128], index: 5, kind: input, shape index: {}]
  %s6 = inlined_call_operand.vmem [shape: f32[2,1,128], index: 6, kind: input, shape index: {}]
  %s7 = inlined_call_operand.hbm [shape: f32[8,128], index: 7, kind: output, shape index: {0}]
  %s8 = inlined_call_operand.hbm [shape: f32[8,128], index: 8, kind: output, shape index: {1}]
  %9 = xla_tuple %s7, %s8
  %s10 = sld [smem:[#allocation0]]
  $region58: #{tpu_custom_call.1} parent=0
    _
  %s12 = ssub.s32 1, %s10
  %s13 = scalar_select 0, %s12, %s10
  %14 = sst [smem:[#allocation3]] %s0
  $region1: #{tpu_custom_call.1} parent=0
    #allocation4 [shape = 'u8[32768]{0}', space=vmem, size = 0x8000, scoped, tag = 'input window, operand 1, single buffered']
    #allocation5 [shape = 's32[1]{0}', space=sflag, size = 0x4, scoped, tag = 'scoped memory for tpu_custom_call.1']
    #allocation6 [shape = 's32[1]{0}', space=sflag, size = 0x4, scoped, tag = 'scoped memory for tpu_custom_call.1']
    #allocation7 [shape = 'u8[32768]{0}', space=vmem, size = 0x8000, scoped, tag = 'input window, operand 2, single buffered']
    #allocation8 [shape = 's32[1]{0}', space=sflag, size = 0x4, scoped, tag = 'scoped memory for tpu_custom_call.1']
    #allocation9 [shape = 'u8[262144]{0}', space=vmem, size = 0x40000, scoped, tag = 'input window, operand 3, single buffered']
    #allocation10 [shape = 'u8[32768]{0}', space=vmem, size = 0x8000, scoped, tag = 'input window, operand 5, single buffered']
    #allocation11 [shape = 's32[1]{0}', space=sflag, size = 0x4, scoped, tag = 'scoped memory for tpu_custom_call.1']
    #allocation12 [shape = 'u8[4096]{0}', space=vmem, size = 0x1000, scoped, tag = 'output window, operand 0, single buffered']
    #allocation13 [shape = 'u8[4096]{0}', space=vmem, size = 0x1000, scoped, tag = 'output window, operand 1, single buffered']
    #allocation14 [shape = 's32[1]{0}', space=sflag, size = 0x4, scoped, tag = 'scoped memory for tpu_custom_call.1']
    %15 = vsyncpa [#allocation5], 0
    %16 = vsyncpa [#allocation8], 0
    %17 = vsyncpa [#allocation11], 0
    %18 = vsyncpa [#allocation6], 0
    %19 = vsyncpa [#allocation14], 0
    // Predicated region
    $region2: #{tpu_custom_call.1} parent=1 // pred_check
      _
    $region3: #{tpu_custom_call.1} parent=1 // pred_check_branch
      %21 = sbr.rel (0) target = $region5
    $region4: #{tpu_custom_call.1} parent=1 // pred_region
      %s23 = ssub.s32 1024, 1024
      %24 = vsyncadd [#allocation5], %s23
      %s26 = sshll.u32 [#allocation4], 4
      %s27 = int_to_ptr.vmem [resolvable:$true] %s26
      %29 = dma.hbm_to_vmem [thread:$0]  %s1, 1024, %s27, [#allocation5]
    $region5: #{tpu_custom_call.1} parent=1 // pred_fallthru
      _
    // Predicated region
    $region6: #{tpu_custom_call.1} parent=1 // pred_check
      _
    $region7: #{tpu_custom_call.1} parent=1 // pred_check_branch
      %31 = sbr.rel (0) target = $region9
    $region8: #{tpu_custom_call.1} parent=1 // pred_region
      %s33 = ssub.s32 1024, 1024
      %34 = vsyncadd [#allocation8], %s33
      %s36 = sshll.u32 [#allocation7], 4
      %s37 = int_to_ptr.vmem [resolvable:$true] %s36
      %39 = dma.hbm_to_vmem [thread:$0]  %s2, 1024, %s37, [#allocation8]
    $region9: #{tpu_custom_call.1} parent=1 // pred_fallthru
      _
    // Predicated region
    $region10: #{tpu_custom_call.1} parent=1 // pred_check
      _
    $region11: #{tpu_custom_call.1} parent=1 // pred_check_branch
      %41 = sbr.rel (0) target = $region13
    $region12: #{tpu_custom_call.1} parent=1 // pred_region
      %s42 = sld [smem:[#allocation3]]
      %s44 = ssub.s32 8192, 8192
      %45 = vsyncadd [#allocation8], %s44
      %s46 = smul.addr %s42, 128
      %s47 = smul.addr %s46, 64
      %s48 = scalar_lea.hbm %s3, %s47
      %s49 = sshll.u32 [#allocation9], 4
      %s50 = int_to_ptr.vmem [resolvable:$true] %s49
      %55 = dma.hbm_to_vmem [thread:$0]  %s48, 8192, %s50, [#allocation8], 64, 64, 4
    $region13: #{tpu_custom_call.1} parent=1 // pred_fallthru
      _
    // Predicated region
    $region14: #{tpu_custom_call.1} parent=1 // pred_check
      _
    $region15: #{tpu_custom_call.1} parent=1 // pred_check_branch
      %57 = sbr.rel (0) target = $region17
    $region16: #{tpu_custom_call.1} parent=1 // pred_region
      %s58 = sld [smem:[#allocation3]]
      %p59 = scmp.lt.s32.totalorder %s58, 1
      %s60 = scalar_select %p59, %s58, 1
      %s61 = scalar_lea.vmem %s4, %s60
      %s62 = sld [smem:[#allocation3]]
    $region17: #{tpu_custom_call.1} parent=1 // pred_fallthru
      _
    // Predicated region
    $region18: #{tpu_custom_call.1} parent=1 // pred_check
      _
    $region19: #{tpu_custom_call.1} parent=1 // pred_check_branch
      %64 = sbr.rel (0) target = $region21
    $region20: #{tpu_custom_call.1} parent=1 // pred_region
      %s65 = sld [smem:[#allocation3]]
      %s67 = ssub.s32 1024, 1024
      %68 = vsyncadd [#allocation11], %s67
      %s69 = smul.addr %s65, 16
      %s70 = smul.addr %s69, 64
      %s71 = scalar_lea.hbm %s5, %s70
      %s72 = sshll.u32 [#allocation10], 4
      %s73 = int_to_ptr.vmem [resolvable:$true] %s72
      %78 = dma.hbm_to_vmem [thread:$0]  %s71, 1024, %s73, [#allocation11], 64, 64, 4
    $region21: #{tpu_custom_call.1} parent=1 // pred_fallthru
      _
    // Predicated region
    $region22: #{tpu_custom_call.1} parent=1 // pred_check
      _
    $region23: #{tpu_custom_call.1} parent=1 // pred_check_branch
      %80 = sbr.rel (0) target = $region25
    $region24: #{tpu_custom_call.1} parent=1 // pred_region
      %s81 = sld [smem:[#allocation3]]
      %p82 = scmp.lt.s32.totalorder %s81, 1
      %s83 = scalar_select %p82, %s81, 1
      %s84 = scalar_lea.vmem %s6, %s83
      %s85 = sld [smem:[#allocation3]]
    $region25: #{tpu_custom_call.1} parent=1 // pred_fallthru
      _
    // Predicated region
    $region26: #{tpu_custom_call.1} parent=1 // pred_check
      _
    $region27: #{tpu_custom_call.1} parent=1 // pred_check_branch
      %87 = sbr.rel (0) target = $region29
    $region28: #{tpu_custom_call.1} parent=1 // pred_region
      %88 = dma.done [#allocation5], 1024
    $region29: #{tpu_custom_call.1} parent=1 // pred_fallthru
      _
    // Predicated region
    $region30: #{tpu_custom_call.1} parent=1 // pred_check
      _
    $region31: #{tpu_custom_call.1} parent=1 // pred_check_branch
      %90 = sbr.rel (0) target = $region33
    $region32: #{tpu_custom_call.1} parent=1 // pred_region
      %91 = dma.done [#allocation8], 1024
    $region33: #{tpu_custom_call.1} parent=1 // pred_fallthru
      _
    // Predicated region
    $region34: #{tpu_custom_call.1} parent=1 // pred_check
      _
    $region35: #{tpu_custom_call.1} parent=1 // pred_check_branch
      %93 = sbr.rel (0) target = $region37
    $region36: #{tpu_custom_call.1} parent=1 // pred_region
      %94 = dma.done [#allocation8], 8192
    $region37: #{tpu_custom_call.1} parent=1 // pred_fallthru
      _
    // Predicated region
    $region38: #{tpu_custom_call.1} parent=1 // pred_check
      _
    $region39: #{tpu_custom_call.1} parent=1 // pred_check_branch
      %96 = sbr.rel (0) target = $region41
    $region40: #{tpu_custom_call.1} parent=1 // pred_region
      %97 = dma.done [#allocation11], 1024
    $region41: #{tpu_custom_call.1} parent=1 // pred_fallthru
      _
    %s98 = sld [smem:[#allocation3]]
    %p99 = scmp.lt.s32.totalorder %s98, 1
    %s100 = scalar_select %p99, %s98, 1
    %s101 = scalar_lea.vmem %s4, %s100
    %s102 = sld [smem:[#allocation3]]
    %p103 = scmp.lt.s32.totalorder %s102, 1
    %s104 = scalar_select %p103, %s102, 1
    %s105 = scalar_lea.vmem %s6, %s104
    %s106 = sld [smem:[#allocation3]]
    %s107 = sld [smem:[#allocation3]]
    %p108 = scmp.lt.s32.totalorder %s107, 1
    %s109 = scalar_select %p108, %s107, 1
    %s110 = scalar_lea.vmem %s4, %s109
    %s111 = sld [smem:[#allocation3]]
    %s112 = sld [smem:[#allocation3]]
    %s113 = sld [smem:[#allocation3]]
    %p114 = scmp.lt.s32.totalorder %s113, 1
    %s115 = scalar_select %p114, %s113, 1
    %s116 = scalar_lea.vmem %s6, %s115
    %s117 = sld [smem:[#allocation3]]
    %v119 = vld [vmem:[#allocation4] sm:$0xff]
    %v120 = vld [vmem:[#allocation4 + $0x8] sm:$0xff]
    %v121 = vld [vmem:[#allocation4 + $0x10] sm:$0xff]
    %v122 = vld [vmem:[#allocation4 + $0x18] sm:$0xff]
    %v123 = vld [vmem:[#allocation4 + $0x20] sm:$0xff]
    %v124 = vld [vmem:[#allocation4 + $0x28] sm:$0xff]
    %v125 = vld [vmem:[#allocation4 + $0x30] sm:$0xff]
    %v126 = vld [vmem:[#allocation4 + $0x38] sm:$0xff]
    %v127 = vld [vmem:[#allocation7] sm:$0xff]
    %v128 = vld [vmem:[#allocation7 + $0x8] sm:$0xff]
    %v129 = vld [vmem:[#allocation7 + $0x10] sm:$0xff]
    %v130 = vld [vmem:[#allocation7 + $0x18] sm:$0xff]
    %v131 = vld [vmem:[#allocation7 + $0x20] sm:$0xff]
    %v132 = vld [vmem:[#allocation7 + $0x28] sm:$0xff]
    %v133 = vld [vmem:[#allocation7 + $0x30] sm:$0xff]
    %v134 = vld [vmem:[#allocation7 + $0x38] sm:$0xff]
    %v135 = vpack.c.bf16 %v127, %v119
    %v136 = vpack.c.bf16 %v128, %v120
    %v137 = vpack.c.bf16 %v129, %v121
    %v138 = vpack.c.bf16 %v130, %v122
    %v139 = vpack.c.bf16 %v131, %v123
    %v140 = vpack.c.bf16 %v132, %v124
    %v141 = vpack.c.bf16 %v133, %v125
    %v142 = vpack.c.bf16 %v134, %v126
    %v143 = vld [vmem:[#allocation9] sm:$0xf]
    %v144 = vld [vmem:[#allocation9 + $0x4] sm:$0xf]
    %v145 = vld [vmem:[#allocation9 + $0x8] sm:$0xf]
    %v146 = vld [vmem:[#allocation9 + $0xc] sm:$0xf]
    %v147 = vld [vmem:[#allocation9 + $0x10] sm:$0xf]
    %v148 = vld [vmem:[#allocation9 + $0x14] sm:$0xf]
    %v149 = vld [vmem:[#allocation9 + $0x18] sm:$0xf]
    %v150 = vld [vmem:[#allocation9 + $0x1c] sm:$0xf]
    %v151 = vld [vmem:[#allocation9 + $0x20] sm:$0xf]
    %v152 = vld [vmem:[#allocation9 + $0x24] sm:$0xf]
    %v153 = vld [vmem:[#allocation9 + $0x28] sm:$0xf]
    %v154 = vld [vmem:[#allocation9 + $0x2c] sm:$0xf]
    %v155 = vld [vmem:[#allocation9 + $0x30] sm:$0xf]
    %v156 = vld [vmem:[#allocation9 + $0x34] sm:$0xf]
    %v157 = vld [vmem:[#allocation9 + $0x38] sm:$0xf]
    %v158 = vld [vmem:[#allocation9 + $0x3c] sm:$0xf]
    %v159 = vld [vmem:[#allocation9 + $0x40] sm:$0xf]
    %v160 = vld [vmem:[#allocation9 + $0x44] sm:$0xf]
    %v161 = vld [vmem:[#allocation9 + $0x48] sm:$0xf]
    %v162 = vld [vmem:[#allocation9 + $0x4c] sm:$0xf]
    %v163 = vld [vmem:[#allocation9 + $0x50] sm:$0xf]
    %v164 = vld [vmem:[#allocation9 + $0x54] sm:$0xf]
    %v165 = vld [vmem:[#allocation9 + $0x58] sm:$0xf]
    %v166 = vld [vmem:[#allocation9 + $0x5c] sm:$0xf]
    %v167 = vld [vmem:[#allocation9 + $0x60] sm:$0xf]
    %v168 = vld [vmem:[#allocation9 + $0x64] sm:$0xf]
    %v169 = vld [vmem:[#allocation9 + $0x68] sm:$0xf]
    %v170 = vld [vmem:[#allocation9 + $0x6c] sm:$0xf]
    %v171 = vld [vmem:[#allocation9 + $0x70] sm:$0xf]
    %v172 = vld [vmem:[#allocation9 + $0x74] sm:$0xf]
    %v173 = vld [vmem:[#allocation9 + $0x78] sm:$0xf]
    %v174 = vld [vmem:[#allocation9 + $0x7c] sm:$0xf]
    %v175 = vld [vmem:[#allocation9 + $0x80] sm:$0xf]
    %v176 = vld [vmem:[#allocation9 + $0x84] sm:$0xf]
    %v177 = vld [vmem:[#allocation9 + $0x88] sm:$0xf]
    %v178 = vld [vmem:[#allocation9 + $0x8c] sm:$0xf]
    %v179 = vld [vmem:[#allocation9 + $0x90] sm:$0xf]
    %v180 = vld [vmem:[#allocation9 + $0x94] sm:$0xf]
    %v181 = vld [vmem:[#allocation9 + $0x98] sm:$0xf]
    %v182 = vld [vmem:[#allocation9 + $0x9c] sm:$0xf]
    %v183 = vld [vmem:[#allocation9 + $0xa0] sm:$0xf]
    %v184 = vld [vmem:[#allocation9 + $0xa4] sm:$0xf]
    %v185 = vld [vmem:[#allocation9 + $0xa8] sm:$0xf]
    %v186 = vld [vmem:[#allocation9 + $0xac] sm:$0xf]
    %v187 = vld [vmem:[#allocation9 + $0xb0] sm:$0xf]
    %v188 = vld [vmem:[#allocation9 + $0xb4] sm:$0xf]
    %v189 = vld [vmem:[#allocation9 + $0xb8] sm:$0xf]
    %v190 = vld [vmem:[#allocation9 + $0xbc] sm:$0xf]
    %v191 = vld [vmem:[#allocation9 + $0xc0] sm:$0xf]
    %v192 = vld [vmem:[#allocation9 + $0xc4] sm:$0xf]
    %v193 = vld [vmem:[#allocation9 + $0xc8] sm:$0xf]
    %v194 = vld [vmem:[#allocation9 + $0xcc] sm:$0xf]
    %v195 = vld [vmem:[#allocation9 + $0xd0] sm:$0xf]
    %v196 = vld [vmem:[#allocation9 + $0xd4] sm:$0xf]
    %v197 = vld [vmem:[#allocation9 + $0xd8] sm:$0xf]
    %v198 = vld [vmem:[#allocation9 + $0xdc] sm:$0xf]
    %v199 = vld [vmem:[#allocation9 + $0xe0] sm:$0xf]
    %v200 = vld [vmem:[#allocation9 + $0xe4] sm:$0xf]
    %v201 = vld [vmem:[#allocation9 + $0xe8] sm:$0xf]
    %v202 = vld [vmem:[#allocation9 + $0xec] sm:$0xf]
    %v203 = vld [vmem:[#allocation9 + $0xf0] sm:$0xf]
    %v204 = vld [vmem:[#allocation9 + $0xf4] sm:$0xf]
    %v205 = vld [vmem:[#allocation9 + $0xf8] sm:$0xf]
    %v206 = vld [vmem:[#allocation9 + $0xfc] sm:$0xf]
    %v207 = vld [vmem:[#allocation9 + $0x100] sm:$0xf]
    %v208 = vld [vmem:[#allocation9 + $0x104] sm:$0xf]
    %v209 = vld [vmem:[#allocation9 + $0x108] sm:$0xf]
    %v210 = vld [vmem:[#allocation9 + $0x10c] sm:$0xf]
    %v211 = vld [vmem:[#allocation9 + $0x110] sm:$0xf]
    %v212 = vld [vmem:[#allocation9 + $0x114] sm:$0xf]
    %v213 = vld [vmem:[#allocation9 + $0x118] sm:$0xf]
    %v214 = vld [vmem:[#allocation9 + $0x11c] sm:$0xf]
    %v215 = vld [vmem:[#allocation9 + $0x120] sm:$0xf]
    %v216 = vld [vmem:[#allocation9 + $0x124] sm:$0xf]
    %v217 = vld [vmem:[#allocation9 + $0x128] sm:$0xf]
    %v218 = vld [vmem:[#allocation9 + $0x12c] sm:$0xf]
    %v219 = vld [vmem:[#allocation9 + $0x130] sm:$0xf]
    %v220 = vld [vmem:[#allocation9 + $0x134] sm:$0xf]
    %v221 = vld [vmem:[#allocation9 + $0x138] sm:$0xf]
    %v222 = vld [vmem:[#allocation9 + $0x13c] sm:$0xf]
    %v223 = vld [vmem:[#allocation9 + $0x140] sm:$0xf]
    %v224 = vld [vmem:[#allocation9 + $0x144] sm:$0xf]
    %v225 = vld [vmem:[#allocation9 + $0x148] sm:$0xf]
    %v226 = vld [vmem:[#allocation9 + $0x14c] sm:$0xf]
    %v227 = vld [vmem:[#allocation9 + $0x150] sm:$0xf]
    %v228 = vld [vmem:[#allocation9 + $0x154] sm:$0xf]
    %v229 = vld [vmem:[#allocation9 + $0x158] sm:$0xf]
    %v230 = vld [vmem:[#allocation9 + $0x15c] sm:$0xf]
    %v231 = vld [vmem:[#allocation9 + $0x160] sm:$0xf]
    %v232 = vld [vmem:[#allocation9 + $0x164] sm:$0xf]
    %v233 = vld [vmem:[#allocation9 + $0x168] sm:$0xf]
    %v234 = vld [vmem:[#allocation9 + $0x16c] sm:$0xf]
    %v235 = vld [vmem:[#allocation9 + $0x170] sm:$0xf]
    %v236 = vld [vmem:[#allocation9 + $0x174] sm:$0xf]
    %v237 = vld [vmem:[#allocation9 + $0x178] sm:$0xf]
    %v238 = vld [vmem:[#allocation9 + $0x17c] sm:$0xf]
    %v239 = vld [vmem:[#allocation9 + $0x180] sm:$0xf]
    %v240 = vld [vmem:[#allocation9 + $0x184] sm:$0xf]
    %v241 = vld [vmem:[#allocation9 + $0x188] sm:$0xf]
    %v242 = vld [vmem:[#allocation9 + $0x18c] sm:$0xf]
    %v243 = vld [vmem:[#allocation9 + $0x190] sm:$0xf]
    %v244 = vld [vmem:[#allocation9 + $0x194] sm:$0xf]
    %v245 = vld [vmem:[#allocation9 + $0x198] sm:$0xf]
    %v246 = vld [vmem:[#allocation9 + $0x19c] sm:$0xf]
    %v247 = vld [vmem:[#allocation9 + $0x1a0] sm:$0xf]
    %v248 = vld [vmem:[#allocation9 + $0x1a4] sm:$0xf]
    %v249 = vld [vmem:[#allocation9 + $0x1a8] sm:$0xf]
    %v250 = vld [vmem:[#allocation9 + $0x1ac] sm:$0xf]
    %v251 = vld [vmem:[#allocation9 + $0x1b0] sm:$0xf]
    %v252 = vld [vmem:[#allocation9 + $0x1b4] sm:$0xf]
    %v253 = vld [vmem:[#allocation9 + $0x1b8] sm:$0xf]
    %v254 = vld [vmem:[#allocation9 + $0x1bc] sm:$0xf]
    %v255 = vld [vmem:[#allocation9 + $0x1c0] sm:$0xf]
    %v256 = vld [vmem:[#allocation9 + $0x1c4] sm:$0xf]
    %v257 = vld [vmem:[#allocation9 + $0x1c8] sm:$0xf]
    %v258 = vld [vmem:[#allocation9 + $0x1cc] sm:$0xf]
    %v259 = vld [vmem:[#allocation9 + $0x1d0] sm:$0xf]
    %v260 = vld [vmem:[#allocation9 + $0x1d4] sm:$0xf]
    %v261 = vld [vmem:[#allocation9 + $0x1d8] sm:$0xf]
    %v262 = vld [vmem:[#allocation9 + $0x1dc] sm:$0xf]
    %v263 = vld [vmem:[#allocation9 + $0x1e0] sm:$0xf]
    %v264 = vld [vmem:[#allocation9 + $0x1e4] sm:$0xf]
    %v265 = vld [vmem:[#allocation9 + $0x1e8] sm:$0xf]
    %v266 = vld [vmem:[#allocation9 + $0x1ec] sm:$0xf]
    %v267 = vld [vmem:[#allocation9 + $0x1f0] sm:$0xf]
    %v268 = vld [vmem:[#allocation9 + $0x1f4] sm:$0xf]
    %v269 = vld [vmem:[#allocation9 + $0x1f8] sm:$0xf]
    %v270 = vld [vmem:[#allocation9 + $0x1fc] sm:$0xf]
    %v271 = vld [vmem:[%s110] sm:$0x1]
    %v272 = vld [vmem:[#allocation10] sm:$0xf]
    %v273 = vld [vmem:[#allocation10 + $0x4] sm:$0xf]
    %v274 = vld [vmem:[#allocation10 + $0x8] sm:$0xf]
    %v275 = vld [vmem:[#allocation10 + $0xc] sm:$0xf]
    %v276 = vld [vmem:[#allocation10 + $0x10] sm:$0xf]
    %v277 = vld [vmem:[#allocation10 + $0x14] sm:$0xf]
    %v278 = vld [vmem:[#allocation10 + $0x18] sm:$0xf]
    %v279 = vld [vmem:[#allocation10 + $0x1c] sm:$0xf]
    %v280 = vld [vmem:[#allocation10 + $0x20] sm:$0xf]
    %v281 = vld [vmem:[#allocation10 + $0x24] sm:$0xf]
    %v282 = vld [vmem:[#allocation10 + $0x28] sm:$0xf]
    %v283 = vld [vmem:[#allocation10 + $0x2c] sm:$0xf]
    %v284 = vld [vmem:[#allocation10 + $0x30] sm:$0xf]
    %v285 = vld [vmem:[#allocation10 + $0x34] sm:$0xf]
    %v286 = vld [vmem:[#allocation10 + $0x38] sm:$0xf]
    %v287 = vld [vmem:[#allocation10 + $0x3c] sm:$0xf]
    %v288 = vld [vmem:[%s116] sm:$0x1]
    %v290 = vlaneseq
    %v291 = vshrl.u32 %v290, 7
    %v292 = vsub.s32 0, %v291
    %v293 = vrot.slane %v271, %v292
    %v423 = vunpack.c.l.b16 %v143
    %v424 = vunpack.c.l.b16 %v144
    %v425 = vunpack.c.l.b16 %v145
    %v426 = vunpack.c.l.b16 %v146
    %v427 = vunpack.c.l.b16 %v147
    %v428 = vunpack.c.l.b16 %v148
    %v429 = vunpack.c.l.b16 %v149
    %v430 = vunpack.c.l.b16 %v150
    %v431 = vunpack.c.l.b16 %v151
    %v432 = vunpack.c.l.b16 %v152
    %v433 = vunpack.c.l.b16 %v153
    %v434 = vunpack.c.l.b16 %v154
    %v435 = vunpack.c.l.b16 %v155
    %v436 = vunpack.c.l.b16 %v156
    %v437 = vunpack.c.l.b16 %v157
    %v438 = vunpack.c.l.b16 %v158
    %v439 = vunpack.c.l.b16 %v159
    %v440 = vunpack.c.l.b16 %v160
    %v441 = vunpack.c.l.b16 %v161
    %v442 = vunpack.c.l.b16 %v162
    %v443 = vunpack.c.l.b16 %v163
    %v444 = vunpack.c.l.b16 %v164
    %v445 = vunpack.c.l.b16 %v165
    %v446 = vunpack.c.l.b16 %v166
    %v447 = vunpack.c.l.b16 %v167
    %v448 = vunpack.c.l.b16 %v168
    %v449 = vunpack.c.l.b16 %v169
    %v450 = vunpack.c.l.b16 %v170
    %v451 = vunpack.c.l.b16 %v171
    %v452 = vunpack.c.l.b16 %v172
    %v453 = vunpack.c.l.b16 %v173
    %v454 = vunpack.c.l.b16 %v174
    %v455 = vunpack.c.l.b16 %v175
    %v456 = vunpack.c.l.b16 %v176
    %v457 = vunpack.c.l.b16 %v177
    %v458 = vunpack.c.l.b16 %v178
    %v459 = vunpack.c.l.b16 %v179
    %v460 = vunpack.c.l.b16 %v180
    %v461 = vunpack.c.l.b16 %v181
    %v462 = vunpack.c.l.b16 %v182
    %v463 = vunpack.c.l.b16 %v183
    %v464 = vunpack.c.l.b16 %v184
    %v465 = vunpack.c.l.b16 %v185
    %v466 = vunpack.c.l.b16 %v186
    %v467 = vunpack.c.l.b16 %v187
    %v468 = vunpack.c.l.b16 %v188
    %v469 = vunpack.c.l.b16 %v189
    %v470 = vunpack.c.l.b16 %v190
    %v471 = vunpack.c.l.b16 %v191
    %v472 = vunpack.c.l.b16 %v192
    %v473 = vunpack.c.l.b16 %v193
    %v474 = vunpack.c.l.b16 %v194
    %v475 = vunpack.c.l.b16 %v195
    %v476 = vunpack.c.l.b16 %v196
    %v477 = vunpack.c.l.b16 %v197
    %v478 = vunpack.c.l.b16 %v198
    %v479 = vunpack.c.l.b16 %v199
    %v480 = vunpack.c.l.b16 %v200
    %v481 = vunpack.c.l.b16 %v201
    %v482 = vunpack.c.l.b16 %v202
    %v483 = vunpack.c.l.b16 %v203
    %v484 = vunpack.c.l.b16 %v204
    %v485 = vunpack.c.l.b16 %v205
    %v486 = vunpack.c.l.b16 %v206
    %v487 = vunpack.c.l.b16 %v207
    %v488 = vunpack.c.l.b16 %v208
    %v489 = vunpack.c.l.b16 %v209
    %v490 = vunpack.c.l.b16 %v210
    %v491 = vunpack.c.l.b16 %v211
    %v492 = vunpack.c.l.b16 %v212
    %v493 = vunpack.c.l.b16 %v213
    %v494 = vunpack.c.l.b16 %v214
    %v495 = vunpack.c.l.b16 %v215
    %v496 = vunpack.c.l.b16 %v216
    %v497 = vunpack.c.l.b16 %v217
    %v498 = vunpack.c.l.b16 %v218
    %v499 = vunpack.c.l.b16 %v219
    %v500 = vunpack.c.l.b16 %v220
    %v501 = vunpack.c.l.b16 %v221
    %v502 = vunpack.c.l.b16 %v222
    %v503 = vunpack.c.l.b16 %v223
    %v504 = vunpack.c.l.b16 %v224
    %v505 = vunpack.c.l.b16 %v225
    %v506 = vunpack.c.l.b16 %v226
    %v507 = vunpack.c.l.b16 %v227
    %v508 = vunpack.c.l.b16 %v228
    %v509 = vunpack.c.l.b16 %v229
    %v510 = vunpack.c.l.b16 %v230
    %v511 = vunpack.c.l.b16 %v231
    %v512 = vunpack.c.l.b16 %v232
    %v513 = vunpack.c.l.b16 %v233
    %v514 = vunpack.c.l.b16 %v234
    %v515 = vunpack.c.l.b16 %v235
    %v516 = vunpack.c.l.b16 %v236
    %v517 = vunpack.c.l.b16 %v237
    %v518 = vunpack.c.l.b16 %v238
    %v519 = vunpack.c.l.b16 %v239
    %v520 = vunpack.c.l.b16 %v240
    %v521 = vunpack.c.l.b16 %v241
    %v522 = vunpack.c.l.b16 %v242
    %v523 = vunpack.c.l.b16 %v243
    %v524 = vunpack.c.l.b16 %v244
    %v525 = vunpack.c.l.b16 %v245
    %v526 = vunpack.c.l.b16 %v246
    %v527 = vunpack.c.l.b16 %v247
    %v528 = vunpack.c.l.b16 %v248
    %v529 = vunpack.c.l.b16 %v249
    %v530 = vunpack.c.l.b16 %v250
    %v531 = vunpack.c.l.b16 %v251
    %v532 = vunpack.c.l.b16 %v252
    %v533 = vunpack.c.l.b16 %v253
    %v534 = vunpack.c.l.b16 %v254
    %v535 = vunpack.c.l.b16 %v255
    %v536 = vunpack.c.l.b16 %v256
    %v537 = vunpack.c.l.b16 %v257
    %v538 = vunpack.c.l.b16 %v258
    %v539 = vunpack.c.l.b16 %v259
    %v540 = vunpack.c.l.b16 %v260
    %v541 = vunpack.c.l.b16 %v261
    %v542 = vunpack.c.l.b16 %v262
    %v543 = vunpack.c.l.b16 %v263
    %v544 = vunpack.c.l.b16 %v264
    %v545 = vunpack.c.l.b16 %v265
    %v546 = vunpack.c.l.b16 %v266
    %v547 = vunpack.c.l.b16 %v267
    %v548 = vunpack.c.l.b16 %v268
    %v549 = vunpack.c.l.b16 %v269
    %v550 = vunpack.c.l.b16 %v270
    %v551 = vpack.c.b16 %v424, %v423
    %v552 = vpack.c.b16 %v426, %v425
    %v553 = vpack.c.b16 %v428, %v427
    %v554 = vpack.c.b16 %v430, %v429
    %v555 = vpack.c.b16 %v432, %v431
    %v556 = vpack.c.b16 %v434, %v433
    %v557 = vpack.c.b16 %v436, %v435
    %v558 = vpack.c.b16 %v438, %v437
    %v559 = vpack.c.b16 %v440, %v439
    %v560 = vpack.c.b16 %v442, %v441
    %v561 = vpack.c.b16 %v444, %v443
    %v562 = vpack.c.b16 %v446, %v445
    %v563 = vpack.c.b16 %v448, %v447
    %v564 = vpack.c.b16 %v450, %v449
    %v565 = vpack.c.b16 %v452, %v451
    %v566 = vpack.c.b16 %v454, %v453
    %v567 = vpack.c.b16 %v456, %v455
    %v568 = vpack.c.b16 %v458, %v457
    %v569 = vpack.c.b16 %v460, %v459
    %v570 = vpack.c.b16 %v462, %v461
    %v571 = vpack.c.b16 %v464, %v463
    %v572 = vpack.c.b16 %v466, %v465
    %v573 = vpack.c.b16 %v468, %v467
    %v574 = vpack.c.b16 %v470, %v469
    %v575 = vpack.c.b16 %v472, %v471
    %v576 = vpack.c.b16 %v474, %v473
    %v577 = vpack.c.b16 %v476, %v475
    %v578 = vpack.c.b16 %v478, %v477
    %v579 = vpack.c.b16 %v480, %v479
    %v580 = vpack.c.b16 %v482, %v481
    %v581 = vpack.c.b16 %v484, %v483
    %v582 = vpack.c.b16 %v486, %v485
    %v583 = vpack.c.b16 %v488, %v487
    %v584 = vpack.c.b16 %v490, %v489
    %v585 = vpack.c.b16 %v492, %v491
    %v586 = vpack.c.b16 %v494, %v493
    %v587 = vpack.c.b16 %v496, %v495
    %v588 = vpack.c.b16 %v498, %v497
    %v589 = vpack.c.b16 %v500, %v499
    %v590 = vpack.c.b16 %v502, %v501
    %v591 = vpack.c.b16 %v504, %v503
    %v592 = vpack.c.b16 %v506, %v505
    %v593 = vpack.c.b16 %v508, %v507
    %v594 = vpack.c.b16 %v510, %v509
    %v595 = vpack.c.b16 %v512, %v511
    %v596 = vpack.c.b16 %v514, %v513
    %v597 = vpack.c.b16 %v516, %v515
    %v598 = vpack.c.b16 %v518, %v517
    %v599 = vpack.c.b16 %v520, %v519
    %v600 = vpack.c.b16 %v522, %v521
    %v601 = vpack.c.b16 %v524, %v523
    %v602 = vpack.c.b16 %v526, %v525
    %v603 = vpack.c.b16 %v528, %v527
    %v604 = vpack.c.b16 %v530, %v529
    %v605 = vpack.c.b16 %v532, %v531
    %v606 = vpack.c.b16 %v534, %v533
    %v607 = vpack.c.b16 %v536, %v535
    %v608 = vpack.c.b16 %v538, %v537
    %v609 = vpack.c.b16 %v540, %v539
    %v610 = vpack.c.b16 %v542, %v541
    %v611 = vpack.c.b16 %v544, %v543
    %v612 = vpack.c.b16 %v546, %v545
    %v613 = vpack.c.b16 %v548, %v547
    %v614 = vpack.c.b16 %v550, %v549
    %679 = vmatprep.subr.bf16.mxu0 0
    %680 = vmatpush1.bf16.msra.mxu0 %v551
    %681 = vmatprep.subr.bf16.mxu0 0
    %682 = vmatpush1.bf16.msra.mxu0 %v552
    %683 = vmatprep.subr.bf16.mxu0 0
    %684 = vmatpush1.bf16.msra.mxu0 %v553
    %685 = vmatprep.subr.bf16.mxu0 0
    %686 = vmatpush1.bf16.msra.mxu0 %v554
    %687 = vmatprep.subr.bf16.mxu0 0
    %688 = vmatpush1.bf16.msra.mxu0 %v555
    %689 = vmatprep.subr.bf16.mxu0 0
    %690 = vmatpush1.bf16.msra.mxu0 %v556
    %691 = vmatprep.subr.bf16.mxu0 0
    %692 = vmatpush1.bf16.msra.mxu0 %v557
    %693 = vmatprep.subr.bf16.mxu0 0
    %694 = vmatpush1.bf16.msra.mxu0 %v558
    %695 = vmatprep.subr.bf16.mxu0 0
    %696 = vmatpush1.bf16.msra.mxu0 %v559
    %697 = vmatprep.subr.bf16.mxu0 0
    %698 = vmatpush1.bf16.msra.mxu0 %v560
    %699 = vmatprep.subr.bf16.mxu0 0
    %700 = vmatpush1.bf16.msra.mxu0 %v561
    %701 = vmatprep.subr.bf16.mxu0 0
    %702 = vmatpush1.bf16.msra.mxu0 %v562
    %703 = vmatprep.subr.bf16.mxu0 0
    %704 = vmatpush1.bf16.msra.mxu0 %v563
    %705 = vmatprep.subr.bf16.mxu0 0
    %706 = vmatpush1.bf16.msra.mxu0 %v564
    %707 = vmatprep.subr.bf16.mxu0 0
    %708 = vmatpush1.bf16.msra.mxu0 %v565
    %709 = vmatprep.subr.bf16.mxu0 0
    %710 = vmatpush1.bf16.msra.mxu0 %v566
    %711 = vmatprep.mubr.bf16.mxu0 %v136
    %712 = vmatmul.mubr.bf16.gmra.mrb[0].mxu0 %v135
    %v713 = vpop.f32.mrb[0].mxu0
    %v714 = vadd.f32 %v293, %v713
    %v715 = vpop.f32.mrb[0].mxu0
    %v716 = vpop.f32.mrb[0].mxu0
    %v717 = vadd.f32 %v293, %v716
    %v718 = vpop.f32.mrb[0].mxu0
    %719 = vdwg.mxu0
    %720 = vmatprep.subr.bf16.mxu0 0
    %721 = vmatpush1.bf16.msra.mxu0 %v567
    %722 = vmatprep.subr.bf16.mxu0 0
    %723 = vmatpush1.bf16.msra.mxu0 %v568
    %724 = vmatprep.subr.bf16.mxu0 0
    %725 = vmatpush1.bf16.msra.mxu0 %v569
    %726 = vmatprep.subr.bf16.mxu0 0
    %727 = vmatpush1.bf16.msra.mxu0 %v570
    %728 = vmatprep.subr.bf16.mxu0 0
    %729 = vmatpush1.bf16.msra.mxu0 %v571
    %730 = vmatprep.subr.bf16.mxu0 0
    %731 = vmatpush1.bf16.msra.mxu0 %v572
    %732 = vmatprep.subr.bf16.mxu0 0
    %733 = vmatpush1.bf16.msra.mxu0 %v573
    %734 = vmatprep.subr.bf16.mxu0 0
    %735 = vmatpush1.bf16.msra.mxu0 %v574
    %736 = vmatprep.subr.bf16.mxu0 0
    %737 = vmatpush1.bf16.msra.mxu0 %v575
    %738 = vmatprep.subr.bf16.mxu0 0
    %739 = vmatpush1.bf16.msra.mxu0 %v576
    %740 = vmatprep.subr.bf16.mxu0 0
    %741 = vmatpush1.bf16.msra.mxu0 %v577
    %742 = vmatprep.subr.bf16.mxu0 0
    %743 = vmatpush1.bf16.msra.mxu0 %v578
    %744 = vmatprep.subr.bf16.mxu0 0
    %745 = vmatpush1.bf16.msra.mxu0 %v579
    %746 = vmatprep.subr.bf16.mxu0 0
    %747 = vmatpush1.bf16.msra.mxu0 %v580
    %748 = vmatprep.subr.bf16.mxu0 0
    %749 = vmatpush1.bf16.msra.mxu0 %v581
    %750 = vmatprep.subr.bf16.mxu0 0
    %751 = vmatpush1.bf16.msra.mxu0 %v582
    %752 = vmatprep.mubr.bf16.mxu0 %v138
    %753 = vmatmul.mubr.bf16.gmra.mrb[0].mxu0 %v137
    %v754 = vpop.f32.mrb[0].mxu0
    %v755 = vadd.f32 %v714, %v754
    %v756 = vpop.f32.mrb[0].mxu0
    %v757 = vpop.f32.mrb[0].mxu0
    %v758 = vadd.f32 %v717, %v757
    %v759 = vpop.f32.mrb[0].mxu0
    %760 = vdwg.mxu0
    %761 = vmatprep.subr.bf16.mxu0 0
    %762 = vmatpush1.bf16.msra.mxu0 %v583
    %763 = vmatprep.subr.bf16.mxu0 0
    %764 = vmatpush1.bf16.msra.mxu0 %v584
    %765 = vmatprep.subr.bf16.mxu0 0
    %766 = vmatpush1.bf16.msra.mxu0 %v585
    %767 = vmatprep.subr.bf16.mxu0 0
    %768 = vmatpush1.bf16.msra.mxu0 %v586
    %769 = vmatprep.subr.bf16.mxu0 0
    %770 = vmatpush1.bf16.msra.mxu0 %v587
    %771 = vmatprep.subr.bf16.mxu0 0
    %772 = vmatpush1.bf16.msra.mxu0 %v588
    %773 = vmatprep.subr.bf16.mxu0 0
    %774 = vmatpush1.bf16.msra.mxu0 %v589
    %775 = vmatprep.subr.bf16.mxu0 0
    %776 = vmatpush1.bf16.msra.mxu0 %v590
    %777 = vmatprep.subr.bf16.mxu0 0
    %778 = vmatpush1.bf16.msra.mxu0 %v591
    %779 = vmatprep.subr.bf16.mxu0 0
    %780 = vmatpush1.bf16.msra.mxu0 %v592
    %781 = vmatprep.subr.bf16.mxu0 0
    %782 = vmatpush1.bf16.msra.mxu0 %v593
    %783 = vmatprep.subr.bf16.mxu0 0
    %784 = vmatpush1.bf16.msra.mxu0 %v594
    %785 = vmatprep.subr.bf16.mxu0 0
    %786 = vmatpush1.bf16.msra.mxu0 %v595
    %787 = vmatprep.subr.bf16.mxu0 0
    %788 = vmatpush1.bf16.msra.mxu0 %v596
    %789 = vmatprep.subr.bf16.mxu0 0
    %790 = vmatpush1.bf16.msra.mxu0 %v597
    %791 = vmatprep.subr.bf16.mxu0 0
    %792 = vmatpush1.bf16.msra.mxu0 %v598
    %793 = vmatprep.mubr.bf16.mxu0 %v140
    %794 = vmatmul.mubr.bf16.gmra.mrb[0].mxu0 %v139
    %v795 = vpop.f32.mrb[0].mxu0
    %v796 = vadd.f32 %v755, %v795
    %v797 = vpop.f32.mrb[0].mxu0
    %v798 = vpop.f32.mrb[0].mxu0
    %v799 = vadd.f32 %v758, %v798
    %v800 = vpop.f32.mrb[0].mxu0
    %801 = vdwg.mxu0
    %802 = vmatprep.subr.bf16.mxu0 0
    %803 = vmatpush1.bf16.msra.mxu0 %v599
    %804 = vmatprep.subr.bf16.mxu0 0
    %805 = vmatpush1.bf16.msra.mxu0 %v600
    %806 = vmatprep.subr.bf16.mxu0 0
    %807 = vmatpush1.bf16.msra.mxu0 %v601
    %808 = vmatprep.subr.bf16.mxu0 0
    %809 = vmatpush1.bf16.msra.mxu0 %v602
    %810 = vmatprep.subr.bf16.mxu0 0
    %811 = vmatpush1.bf16.msra.mxu0 %v603
    %812 = vmatprep.subr.bf16.mxu0 0
    %813 = vmatpush1.bf16.msra.mxu0 %v604
    %814 = vmatprep.subr.bf16.mxu0 0
    %815 = vmatpush1.bf16.msra.mxu0 %v605
    %816 = vmatprep.subr.bf16.mxu0 0
    %817 = vmatpush1.bf16.msra.mxu0 %v606
    %818 = vmatprep.subr.bf16.mxu0 0
    %819 = vmatpush1.bf16.msra.mxu0 %v607
    %820 = vmatprep.subr.bf16.mxu0 0
    %821 = vmatpush1.bf16.msra.mxu0 %v608
    %822 = vmatprep.subr.bf16.mxu0 0
    %823 = vmatpush1.bf16.msra.mxu0 %v609
    %824 = vmatprep.subr.bf16.mxu0 0
    %825 = vmatpush1.bf16.msra.mxu0 %v610
    %826 = vmatprep.subr.bf16.mxu0 0
    %827 = vmatpush1.bf16.msra.mxu0 %v611
    %828 = vmatprep.subr.bf16.mxu0 0
    %829 = vmatpush1.bf16.msra.mxu0 %v612
    %830 = vmatprep.subr.bf16.mxu0 0
    %831 = vmatpush1.bf16.msra.mxu0 %v613
    %832 = vmatprep.subr.bf16.mxu0 0
    %833 = vmatpush1.bf16.msra.mxu0 %v614
    %834 = vmatprep.mubr.bf16.mxu0 %v142
    %835 = vmatmul.mubr.bf16.gmra.mrb[0].mxu0 %v141
    %v836 = vpop.f32.mrb[0].mxu0
    %v837 = vadd.f32 %v796, %v836
    %v838 = vpop.f32.mrb[0].mxu0
    %v839 = vpop.f32.mrb[0].mxu0
    %v840 = vadd.f32 %v799, %v839
    %v841 = vpop.f32.mrb[0].mxu0
    %842 = vdwg.mxu0
    %v843 = vmax.f32 %v837, 0.0
    %v844 = vmax.f32 %v840, 0.0
    %v845 = vpack.c.bf16 %v844, %v843
    %v847 = vlaneseq
    %v848 = vshrl.u32 %v847, 7
    %v849 = vsub.s32 0, %v848
    %v850 = vrot.slane %v288, %v849
    %v868 = vunpack.c.l.b16 %v272
    %v869 = vunpack.c.l.b16 %v273
    %v870 = vunpack.c.l.b16 %v274
    %v871 = vunpack.c.l.b16 %v275
    %v872 = vunpack.c.l.b16 %v276
    %v873 = vunpack.c.l.b16 %v277
    %v874 = vunpack.c.l.b16 %v278
    %v875 = vunpack.c.l.b16 %v279
    %v876 = vunpack.c.l.b16 %v280
    %v877 = vunpack.c.l.b16 %v281
    %v878 = vunpack.c.l.b16 %v282
    %v879 = vunpack.c.l.b16 %v283
    %v880 = vunpack.c.l.b16 %v284
    %v881 = vunpack.c.l.b16 %v285
    %v882 = vunpack.c.l.b16 %v286
    %v883 = vunpack.c.l.b16 %v287
    %v884 = vpack.c.b16 %v869, %v868
    %v885 = vpack.c.b16 %v871, %v870
    %v886 = vpack.c.b16 %v873, %v872
    %v887 = vpack.c.b16 %v875, %v874
    %v888 = vpack.c.b16 %v877, %v876
    %v889 = vpack.c.b16 %v879, %v878
    %v890 = vpack.c.b16 %v881, %v880
    %v891 = vpack.c.b16 %v883, %v882
    %900 = vmatprep.subr.bf16.mxu0 0
    %901 = vmatpush1.bf16.msra.mxu0 %v884
    %902 = vmatprep.subr.bf16.mxu0 0
    %903 = vmatpush1.bf16.msra.mxu0 %v885
    %904 = vmatprep.subr.bf16.mxu0 0
    %905 = vmatpush1.bf16.msra.mxu0 %v886
    %906 = vmatprep.subr.bf16.mxu0 0
    %907 = vmatpush1.bf16.msra.mxu0 %v887
    %908 = vmatprep.subr.bf16.mxu0 0
    %909 = vmatpush1.bf16.msra.mxu0 %v888
    %910 = vmatprep.subr.bf16.mxu0 0
    %911 = vmatpush1.bf16.msra.mxu0 %v889
    %912 = vmatprep.subr.bf16.mxu0 0
    %913 = vmatpush1.bf16.msra.mxu0 %v890
    %914 = vmatprep.subr.bf16.mxu0 0
    %915 = vmatpush1.bf16.msra.mxu0 %v891
    %916 = vmatprep.subr.bf16.mxu0 0
    %917 = vmatpush1.bf16.msra.mxu0 0
    %918 = vmatprep.subr.bf16.mxu0 0
    %919 = vmatpush1.bf16.msra.mxu0 0
    %920 = vmatprep.subr.bf16.mxu0 0
    %921 = vmatpush1.bf16.msra.mxu0 0
    %922 = vmatprep.subr.bf16.mxu0 0
    %923 = vmatpush1.bf16.msra.mxu0 0
    %924 = vmatprep.subr.bf16.mxu0 0
    %925 = vmatpush1.bf16.msra.mxu0 0
    %926 = vmatprep.subr.bf16.mxu0 0
    %927 = vmatpush1.bf16.msra.mxu0 0
    %928 = vmatprep.subr.bf16.mxu0 0
    %929 = vmatpush1.bf16.msra.mxu0 0
    %930 = vmatprep.subr.bf16.mxu0 0
    %931 = vmatpush1.bf16.msra.mxu0 0
    %932 = vmatprep.mubr.bf16.mxu0 0
    %933 = vmatmul.mubr.bf16.gmra.mrb[0].mxu0 %v845
    %v934 = vpop.f32.mrb[0].mxu0
    %v935 = vadd.f32 %v850, %v934
    %v936 = vpop.f32.mrb[0].mxu0
    %v937 = vpop.f32.mrb[0].mxu0
    %v938 = vadd.f32 %v850, %v937
    %v939 = vpop.f32.mrb[0].mxu0
    %940 = vdwg.mxu0
    %941 = vst [vmem:[#allocation12] sm:$0xff] %v935
    %942 = vst [vmem:[#allocation13] sm:$0xff] %v938
    // Predicated region
    $region42: #{tpu_custom_call.1} parent=1 // pred_check
      _
    $region43: #{tpu_custom_call.1} parent=1 // pred_check_branch
      %944 = sbr.rel (0) target = $region45
    $region44: #{tpu_custom_call.1} parent=1 // pred_region
      %s946 = ssub.s32 128, 128
      %947 = vsyncadd [#allocation6], %s946
      %s949 = sshll.u32 [#allocation12], 4
      %s950 = int_to_ptr.vmem [resolvable:$true] %s949
      %952 = dma.vmem_to_hbm [thread:$0]  %s950, 128, %s7, [#allocation6]
    $region45: #{tpu_custom_call.1} parent=1 // pred_fallthru
      _
    // Predicated region
    $region46: #{tpu_custom_call.1} parent=1 // pred_check
      _
    $region47: #{tpu_custom_call.1} parent=1 // pred_check_branch
      %954 = sbr.rel (0) target = $region49
    $region48: #{tpu_custom_call.1} parent=1 // pred_region
      %s956 = ssub.s32 128, 128
      %957 = vsyncadd [#allocation14], %s956
      %s959 = sshll.u32 [#allocation13], 4
      %s960 = int_to_ptr.vmem [resolvable:$true] %s959
      %962 = dma.vmem_to_hbm [thread:$0]  %s960, 128, %s8, [#allocation14]
    $region49: #{tpu_custom_call.1} parent=1 // pred_fallthru
      _
    // Predicated region
    $region50: #{tpu_custom_call.1} parent=1 // pred_check
      _
    $region51: #{tpu_custom_call.1} parent=1 // pred_check_branch
      %964 = sbr.rel (0) target = $region53
    $region52: #{tpu_custom_call.1} parent=1 // pred_region
      %965 = dma.done [#allocation6], 128
    $region53: #{tpu_custom_call.1} parent=1 // pred_fallthru
      _
    // Predicated region
    $region54: #{tpu_custom_call.1} parent=1 // pred_check
      _
    $region55: #{tpu_custom_call.1} parent=1 // pred_check_branch
      %967 = sbr.rel (0) target = $region57
    $region56: #{tpu_custom_call.1} parent=1 // pred_region
      %968 = dma.done [#allocation14], 128
    $region57: #{tpu_custom_call.1} parent=1 // pred_fallthru
      _
    %969 = vsyncpa [#allocation5], 1
    %970 = vsyncpa [#allocation8], 1
    %971 = vsyncpa [#allocation11], 1
    %972 = vsyncpa [#allocation6], 1
    %973 = vsyncpa [#allocation14], 1

</llo_original>
